<compile_context>
chip_gen: v7x
topology: tpu7x:2x2x1
jax: 0.10.0
libtpu: 0.0.40
codegen_flags: <defaults>
</compile_context>

<pallas_src>
import functools
import numpy as np
import jax
import jax.numpy as jnp
from jax.experimental import pallas as pl
from jax.experimental.pallas import tpu as pltpu

LANE = 128                      # lane width: channel axis & tap column blocks pad to this
HIGHEST = jax.lax.Precision.HIGHEST   # used only by the f32 host-side reference


def _round_up(x, m):
    return (x + m - 1) // m * m


def _tree_sum(xs):
    """Sum a list of arrays as independent partials (balanced tree)."""
    xs = list(xs)
    while len(xs) > 1:
        nxt = [xs[i] + xs[i + 1] for i in range(0, len(xs) - 1, 2)]
        if len(xs) % 2:
            nxt.append(xs[-1])
        xs = nxt
    return xs[0]


# --------------------------------------------------------------------------------------
# Pallas kernel
# --------------------------------------------------------------------------------------
def make_tcn_kernel(levels_meta, K, L, CP):
    """levels_meta: per level static tuple
       (c_out, dilation, has_down, w1_off, w1_ncols, w2_off, b1_row, bd_row, b2_row)."""

    def kernel(x_ref, w_ref, b_ref, out_ref):
        h = x_ref[...]                                   # (BLp, CP) f32, zero-padded lanes
        BLp = h.shape[0]
        # time index of each row inside its batch element (rows are b*L + t); hoisted once
        t_in_batch = jax.lax.broadcasted_iota(jnp.int32, (BLp, CP), 0) % L

        def taps_to_causal(z_taps, bias_row, dilation):
            """z_taps: (BLp, K*CP) f32 = per-tap matmul results.  Apply the causal
            temporal shift of each tap via a sublane roll (XLU) + per-batch mask
            (VPU), sum independent partials, add bias (f32)."""
            partials = []
            for k in range(K):
                s = (K - 1 - k) * dilation               # temporal shift of tap k
                zk = z_taps[:, k * CP:(k + 1) * CP]      # lane-aligned 128-col slice
                if s == 0:
                    partials.append(zk)
                else:
                    rolled = pltpu.roll(zk, s, axis=0)   # row r <- row r - s (wraps)
                    # zero rows whose source would be before the batch start
                    partials.append(jnp.where(t_in_batch >= s, rolled, 0.0))
            y = _tree_sum(partials)
            return y + b_ref[bias_row:bias_row + 1, :]   # bias add in f32

        for (c_out, d, has_down, w1_off, w1_ncols, w2_off,
             b1_row, bd_row, b2_row) in levels_meta:
            # ---- conv1: ONE wide bf16 matmul over all K taps (+ fused 1x1 downsample) ----
            h_bf = h.astype(jnp.bfloat16)
            z1 = jnp.dot(h_bf, w_ref[:, w1_off:w1_off + w1_ncols],
                         preferred_element_type=jnp.float32)
            y1 = taps_to_causal(z1[:, :K * CP], b1_row, d)
            h1 = jnp.maximum(y1, 0.0)                    # ReLU1 (chomp implicit); dropout1=id

            if has_down:                                 # residual rides for free in conv1
                res = z1[:, K * CP:(K + 1) * CP] + b_ref[bd_row:bd_row + 1, :]
            else:
                res = h                                  # identity residual

            # ---- conv2: ONE wide bf16 matmul over all K taps ----
            z2 = jnp.dot(h1.astype(jnp.bfloat16), w_ref[:, w2_off:w2_off + K * CP],
                         preferred_element_type=jnp.float32)
            y2 = taps_to_causal(z2, b2_row, d)
            h2 = jnp.maximum(y2, 0.0)                    # ReLU2; dropout2=id

            h = jnp.maximum(h2 + res, 0.0)               # block output ReLU

        out_ref[...] = h.astype(out_ref.dtype)           # full 128-lane (unmasked) store

    return kernel


def tcn_forward(x_bcl, w_slab, b_slab, levels_meta, K, CP=LANE):
    """x_bcl: (B, C_in, L) torch layout. Returns (B, C_out, L)."""
    B, c_in, L = x_bcl.shape
    BL = B * L
    BLp = _round_up(BL, 8)
    c_last = levels_meta[-1][0]

    # layout plumbing outside the kernel: (B, C, L) -> (B*L, C) with channels on lanes,
    # padded to a lane-dense (BLp, 128) slab.
    x_flat = jnp.transpose(x_bcl, (0, 2, 1)).reshape(BL, c_in)
    x_pad = jnp.zeros((BLp, CP), jnp.float32).at[:BL, :c_in].set(x_flat)

    kernel = make_tcn_kernel(levels_meta, K, L, CP)
    out_pad = pl.pallas_call(
        kernel,
        out_shape=jax.ShapeDtypeStruct((BLp, CP), jnp.float32),
        in_specs=[pl.BlockSpec(memory_space=pltpu.VMEM)] * 3,   # x, weight slab, bias slab
        out_specs=pl.BlockSpec(memory_space=pltpu.VMEM),
    )(x_pad, w_slab, b_slab)

    out = out_pad[:BL, :c_last]
    return jnp.transpose(out.reshape(B, L, c_last), (0, 2, 1))


# --------------------------------------------------------------------------------------
# Host-side parameter prep (weight_norm fold, slab packing, lane/contraction padding)
# --------------------------------------------------------------------------------------
def weight_norm_effective(v, g):
    """Effective Conv1d weight for torch weight_norm(dim=0): w = g * v / ||v||."""
    norm = jnp.sqrt(jnp.sum(v * v, axis=(1, 2), keepdims=True))
    return v * (g[:, None, None] / norm)


def init_tcn_params(key, num_inputs, num_channels, K):
    """Deterministic synthetic init mirroring TemporalBlock.init_weights (N(0, 0.01))."""
    params = []
    for i, c_out in enumerate(num_channels):
        c_in = num_inputs if i == 0 else num_channels[i - 1]
        key, k1, k2, k3, k4, k5, k6, k7, k8 = jax.random.split(key, 9)

        v1 = 0.01 * jax.random.normal(k1, (c_out, c_in, K), jnp.float32)
        g1 = jax.random.uniform(k2, (c_out,), jnp.float32, 0.5, 1.5)
        w1 = weight_norm_effective(v1, g1)
        b1 = jax.random.uniform(k3, (c_out,), jnp.float32, -1.0, 1.0) / np.sqrt(c_in * K)

        v2 = 0.01 * jax.random.normal(k4, (c_out, c_out, K), jnp.float32)
        g2 = jax.random.uniform(k5, (c_out,), jnp.float32, 0.5, 1.5)
        w2 = weight_norm_effective(v2, g2)
        b2 = jax.random.uniform(k6, (c_out,), jnp.float32, -1.0, 1.0) / np.sqrt(c_out * K)

        if c_in != c_out:
            wd = 0.01 * jax.random.normal(k7, (c_out, c_in, 1), jnp.float32)
            bd = jax.random.uniform(k8, (c_out,), jnp.float32, -1.0, 1.0) / np.sqrt(c_in)
        else:
            wd, bd = None, None

        params.append(dict(w1=w1, b1=b1, w2=w2, b2=b2, wd=wd, bd=bd))
    return params


def pack_for_kernel(params, K, CP=LANE):
    """Pack ALL level weights into one (CP, total_cols) bf16 slab and ALL biases into one
    (8, CP) f32 slab.  Per level the column layout is
        [conv1 tap0 | ... | tapK-1 | (1x1 downsample)]  [conv2 tap0 | ... | tapK-1]
    with every block padded to CP=128 lanes and the contraction (row) dim padded to CP
    channels.  Returns (w_slab, b_slab, levels_meta)."""
    w_cols, b_rows, meta = [], [], []
    col, brow = 0, 0

    def pad_block(w_t):                                   # (c_in, c_out) -> (CP, CP)
        blk = np.zeros((CP, CP), np.float32)
        blk[:w_t.shape[0], :w_t.shape[1]] = w_t
        return blk

    def pad_bias(b):
        row = np.zeros((CP,), np.float32)
        row[:b.shape[0]] = b
        return row

    for i, p in enumerate(params):
        d = 2 ** i
        c_out = p['w1'].shape[0]
        has_down = p['wd'] is not None

        w1_blocks = [pad_block(np.asarray(p['w1'][:, :, k]).T) for k in range(K)]
        if has_down:
            w1_blocks.append(pad_block(np.asarray(p['wd'][:, :, 0]).T))   # fuse downsample
        w1_off, w1_ncols = col, len(w1_blocks) * CP
        w_cols += w1_blocks
        col += w1_ncols

        w2_blocks = [pad_block(np.asarray(p['w2'][:, :, k]).T) for k in range(K)]
        w2_off = col
        w_cols += w2_blocks
        col += K * CP

        b1_row = brow; b_rows.append(pad_bias(np.asarray(p['b1']))); brow += 1
        if has_down:
            bd_row = brow; b_rows.append(pad_bias(np.asarray(p['bd']))); brow += 1
        else:
            bd_row = -1
        b2_row = brow; b_rows.append(pad_bias(np.asarray(p['b2']))); brow += 1

        meta.append((c_out, d, has_down, w1_off, w1_ncols, w2_off, b1_row, bd_row, b2_row))

    w_slab = jnp.asarray(np.concatenate(w_cols, axis=1), dtype=jnp.bfloat16)
    nb = _round_up(len(b_rows), 8)
    b_np = np.zeros((nb, CP), np.float32)
    b_np[:len(b_rows)] = np.stack(b_rows)
    return w_slab, jnp.asarray(b_np), tuple(meta)


# --------------------------------------------------------------------------------------
# Independent reference (lax.conv_general_dilated, exactly the torch computation).
# dot_dtype=None      -> full f32 / HIGHEST precision (torch-equivalent baseline).
# dot_dtype=bfloat16  -> conv inputs cast to bf16 with f32 accumulation (matches the
#                        kernel's MXU precision; elementwise stays f32).
# --------------------------------------------------------------------------------------
def torch_conv1d(x, w, b, *, dilation, padding, dot_dtype=None):
    if dot_dtype is None:
        xc, wc, prec = x, w, HIGHEST
    else:
        xc, wc, prec = x.astype(dot_dtype), w.astype(dot_dtype), None
    y = jax.lax.conv_general_dilated(
        xc, wc, window_strides=(1,), padding=[(padding, padding)],
        rhs_dilation=(dilation,), dimension_numbers=('NCH', 'OIH', 'NCH'),
        precision=prec, preferred_element_type=jnp.float32)
    return y + b[None, :, None]


def reference_forward(x, params, K, dot_dtype=None):
    h = x
    L = x.shape[2]
    for i, p in enumerate(params):
        d = 2 ** i
        pad = (K - 1) * d
        o = torch_conv1d(h, p['w1'], p['b1'], dilation=d, padding=pad,
                         dot_dtype=dot_dtype)[:, :, :L]                      # chomp
        o = jnp.maximum(o, 0.0)                                              # dropout = id
        o = torch_conv1d(o, p['w2'], p['b2'], dilation=d, padding=pad,
                         dot_dtype=dot_dtype)[:, :, :L]
        o = jnp.maximum(o, 0.0)
        res = h if p['wd'] is None else torch_conv1d(h, p['wd'], p['bd'], dilation=1,
                                                     padding=0, dot_dtype=dot_dtype)
        h = jnp.maximum(o + res, 0.0)
    return h


# --------------------------------------------------------------------------------------
# main
# --------------------------------------------------------------------------------------
if __name__ == "__main__":
    B, L = 2, 16                 # batch, sequence length
    num_inputs = 4               # input channels
    num_channels = [32, 32]      # two TemporalBlock levels (dilations 1, 2)
    K = 2                        # kernel_size

    key = jax.random.PRNGKey(0)
    kx, kp = jax.random.split(key)
    x = jax.random.normal(kx, (B, num_inputs, L), jnp.float32)   # torch (N, C, L) layout

    params = init_tcn_params(kp, num_inputs, num_channels, K)
    w_slab, b_slab, levels_meta = pack_for_kernel(params, K, LANE)

    out = tcn_forward(x, w_slab, b_slab, levels_meta, K)
    out = jax.block_until_ready(out)
    assert out.shape == (B, num_channels[-1], L)

    # 1) structural check against a matching-precision reference (bf16 MXU inputs,
    #    f32 accumulation) — validates roll/mask, tap fusion, packing offsets.
    ref_match = reference_forward(x, params, K, dot_dtype=jnp.bfloat16)
    err_match = float(jnp.max(jnp.abs(out - ref_match)))
    assert jnp.allclose(out, ref_match, atol=2e-2, rtol=2e-2), err_match

    # 2) end-to-end accuracy against the full-precision torch-equivalent reference
    #    (bf16 matmuls introduce ~<1% relative RMS error).
    ref_f32 = reference_forward(x, params, K, dot_dtype=None)
    rel_rms = float(jnp.linalg.norm(out - ref_f32) / jnp.linalg.norm(ref_f32))
    assert rel_rms < 3e-2, rel_rms

    print("KERNEL_OK")
</pallas_src>

<mosaic_0001>
module attributes {stable_mosaic.version = 11 : i64} {
  func.func @kernel(%arg0: memref<32x128xf32, #tpu.memory_space<vmem>>, %arg1: memref<128x1152xbf16, #tpu.memory_space<vmem>>, %arg2: memref<8x128xf32, #tpu.memory_space<vmem>>, %arg3: memref<32x128xf32, #tpu.memory_space<vmem>>) attributes {dimension_semantics = [], scalar_prefetch = 0 : i64, scratch_operands = 0 : i64, tpu.core_type = #tpu.core_type<tc>} {
    %c0 = arith.constant 0 : index
    %c0_0 = arith.constant 0 : index
    %0 = vector.load %arg0[%c0, %c0_0] : memref<32x128xf32, #tpu.memory_space<vmem>>, vector<32x128xf32>
    %1 = tpu.iota {dimensions = array<i32: 0>} : vector<32x128xi32>
    %c16_i32 = arith.constant 16 : i32
    %c0_i32 = arith.constant 0 : i32
    %2 = arith.cmpi eq, %c16_i32, %c0_i32 : i32
    %c1_i32 = arith.constant 1 : i32
    %3 = arith.select %2, %c1_i32, %c16_i32 : i32
    %4 = vector.broadcast %3 : i32 to vector<32x128xi32>
    %5 = arith.remsi %1, %4 : vector<32x128xi32>
    %c0_i32_1 = arith.constant 0 : i32
    %6 = vector.broadcast %c0_i32_1 : i32 to vector<32x128xi32>
    %7 = arith.cmpi ne, %5, %6 : vector<32x128xi32>
    %c0_i32_2 = arith.constant 0 : i32
    %8 = vector.broadcast %c0_i32_2 : i32 to vector<32x128xi32>
    %9 = arith.cmpi slt, %5, %8 : vector<32x128xi32>
    %c0_i32_3 = arith.constant 0 : i32
    %10 = arith.cmpi slt, %3, %c0_i32_3 : i32
    %11 = vector.broadcast %10 : i1 to vector<32x128xi1>
    %12 = vector.broadcast %11 : vector<32x128xi1> to vector<32x128xi1>
    %13 = arith.xori %9, %12 : vector<32x128xi1>
    %14 = arith.andi %13, %7 : vector<32x128xi1>
    %15 = vector.broadcast %3 : i32 to vector<32x128xi32>
    %16 = arith.addi %5, %15 : vector<32x128xi32>
    %17 = arith.select %14, %16, %5 : vector<32x128xi1>, vector<32x128xi32>
    %18 = arith.truncf %0 : vector<32x128xf32> to vector<32x128xbf16>
    %c0_4 = arith.constant 0 : index
    %c0_5 = arith.constant 0 : index
    %19 = vector.load %arg1[%c0_4, %c0_5] : memref<128x1152xbf16, #tpu.memory_space<vmem>>, vector<128x384xbf16>
    %cst = arith.constant dense<0.000000e+00> : vector<32x384xf32>
    %20 = tpu.matmul %18, %19, %cst {dimension_numbers = #tpu.dot_dimension_numbers<[1], [0], [0], [1], [0, 0, 1, 1], [], []>} : vector<32x128xbf16>, vector<128x384xbf16>, vector<32x384xf32> -> vector<32x384xf32>
    %21 = vector.extract_strided_slice %20 {offsets = [0, 0], sizes = [32, 256], strides = [1, 1]} : vector<32x384xf32> to vector<32x256xf32>
    %22 = vector.extract_strided_slice %21 {offsets = [0, 0], sizes = [32, 128], strides = [1, 1]} : vector<32x256xf32> to vector<32x128xf32>
    %c1_i32_6 = arith.constant 1 : i32
    %23 = tpu.dynamic_rotate %22 by %c1_i32_6 dim 0 : vector<32x128xf32>, i32 -> vector<32x128xf32>
    %c1_i32_7 = arith.constant 1 : i32
    %24 = vector.broadcast %c1_i32_7 : i32 to vector<32x128xi32>
    %25 = arith.cmpi sge, %17, %24 : vector<32x128xi32>
    %cst_8 = arith.constant 0.000000e+00 : f32
    %26 = vector.broadcast %cst_8 : f32 to vector<32x128xf32>
    %27 = arith.select %25, %23, %26 : vector<32x128xi1>, vector<32x128xf32>
    %28 = vector.extract_strided_slice %21 {offsets = [0, 128], sizes = [32, 128], strides = [1, 1]} : vector<32x256xf32> to vector<32x128xf32>
    %29 = arith.addf %27, %28 : vector<32x128xf32>
    %c0_9 = arith.constant 0 : index
    %c0_10 = arith.constant 0 : index
    %30 = vector.load %arg2[%c0_9, %c0_10] : memref<8x128xf32, #tpu.memory_space<vmem>>, vector<1x128xf32>
    %31 = vector.broadcast %30 : vector<1x128xf32> to vector<32x128xf32>
    %32 = arith.addf %29, %31 : vector<32x128xf32>
    %cst_11 = arith.constant 0.000000e+00 : f32
    %33 = vector.broadcast %cst_11 : f32 to vector<32x128xf32>
    %34 = arith.maximumf %32, %33 : vector<32x128xf32>
    %35 = vector.extract_strided_slice %20 {offsets = [0, 256], sizes = [32, 128], strides = [1, 1]} : vector<32x384xf32> to vector<32x128xf32>
    %c1 = arith.constant 1 : index
    %c0_12 = arith.constant 0 : index
    %36 = vector.load %arg2[%c1, %c0_12] : memref<8x128xf32, #tpu.memory_space<vmem>>, vector<1x128xf32>
    %37 = vector.broadcast %36 : vector<1x128xf32> to vector<32x128xf32>
    %38 = arith.addf %35, %37 : vector<32x128xf32>
    %39 = arith.truncf %34 : vector<32x128xf32> to vector<32x128xbf16>
    %c0_13 = arith.constant 0 : index
    %c384 = arith.constant 384 : index
    %40 = vector.load %arg1[%c0_13, %c384] : memref<128x1152xbf16, #tpu.memory_space<vmem>>, vector<128x256xbf16>
    %cst_14 = arith.constant dense<0.000000e+00> : vector<32x256xf32>
    %41 = tpu.matmul %39, %40, %cst_14 {dimension_numbers = #tpu.dot_dimension_numbers<[1], [0], [0], [1], [0, 0, 1, 1], [], []>} : vector<32x128xbf16>, vector<128x256xbf16>, vector<32x256xf32> -> vector<32x256xf32>
    %42 = vector.extract_strided_slice %41 {offsets = [0, 0], sizes = [32, 128], strides = [1, 1]} : vector<32x256xf32> to vector<32x128xf32>
    %c1_i32_15 = arith.constant 1 : i32
    %43 = tpu.dynamic_rotate %42 by %c1_i32_15 dim 0 : vector<32x128xf32>, i32 -> vector<32x128xf32>
    %c1_i32_16 = arith.constant 1 : i32
    %44 = vector.broadcast %c1_i32_16 : i32 to vector<32x128xi32>
    %45 = arith.cmpi sge, %17, %44 : vector<32x128xi32>
    %cst_17 = arith.constant 0.000000e+00 : f32
    %46 = vector.broadcast %cst_17 : f32 to vector<32x128xf32>
    %47 = arith.select %45, %43, %46 : vector<32x128xi1>, vector<32x128xf32>
    %48 = vector.extract_strided_slice %41 {offsets = [0, 128], sizes = [32, 128], strides = [1, 1]} : vector<32x256xf32> to vector<32x128xf32>
    %49 = arith.addf %47, %48 : vector<32x128xf32>
    %c2 = arith.constant 2 : index
    %c0_18 = arith.constant 0 : index
    %50 = vector.load %arg2[%c2, %c0_18] : memref<8x128xf32, #tpu.memory_space<vmem>>, vector<1x128xf32>
    %51 = vector.broadcast %50 : vector<1x128xf32> to vector<32x128xf32>
    %52 = arith.addf %49, %51 : vector<32x128xf32>
    %cst_19 = arith.constant 0.000000e+00 : f32
    %53 = vector.broadcast %cst_19 : f32 to vector<32x128xf32>
    %54 = arith.maximumf %52, %53 : vector<32x128xf32>
    %55 = arith.addf %54, %38 : vector<32x128xf32>
    %cst_20 = arith.constant 0.000000e+00 : f32
    %56 = vector.broadcast %cst_20 : f32 to vector<32x128xf32>
    %57 = arith.maximumf %55, %56 : vector<32x128xf32>
    %58 = arith.truncf %57 : vector<32x128xf32> to vector<32x128xbf16>
    %c0_21 = arith.constant 0 : index
    %c640 = arith.constant 640 : index
    %59 = vector.load %arg1[%c0_21, %c640] : memref<128x1152xbf16, #tpu.memory_space<vmem>>, vector<128x256xbf16>
    %cst_22 = arith.constant dense<0.000000e+00> : vector<32x256xf32>
    %60 = tpu.matmul %58, %59, %cst_22 {dimension_numbers = #tpu.dot_dimension_numbers<[1], [0], [0], [1], [0, 0, 1, 1], [], []>} : vector<32x128xbf16>, vector<128x256xbf16>, vector<32x256xf32> -> vector<32x256xf32>
    %61 = vector.extract_strided_slice %60 {offsets = [0, 0], sizes = [32, 128], strides = [1, 1]} : vector<32x256xf32> to vector<32x128xf32>
    %c2_i32 = arith.constant 2 : i32
    %62 = tpu.dynamic_rotate %61 by %c2_i32 dim 0 : vector<32x128xf32>, i32 -> vector<32x128xf32>
    %c2_i32_23 = arith.constant 2 : i32
    %63 = vector.broadcast %c2_i32_23 : i32 to vector<32x128xi32>
    %64 = arith.cmpi sge, %17, %63 : vector<32x128xi32>
    %cst_24 = arith.constant 0.000000e+00 : f32
    %65 = vector.broadcast %cst_24 : f32 to vector<32x128xf32>
    %66 = arith.select %64, %62, %65 : vector<32x128xi1>, vector<32x128xf32>
    %67 = vector.extract_strided_slice %60 {offsets = [0, 128], sizes = [32, 128], strides = [1, 1]} : vector<32x256xf32> to vector<32x128xf32>
    %68 = arith.addf %66, %67 : vector<32x128xf32>
    %c3 = arith.constant 3 : index
    %c0_25 = arith.constant 0 : index
    %69 = vector.load %arg2[%c3, %c0_25] : memref<8x128xf32, #tpu.memory_space<vmem>>, vector<1x128xf32>
    %70 = vector.broadcast %69 : vector<1x128xf32> to vector<32x128xf32>
    %71 = arith.addf %68, %70 : vector<32x128xf32>
    %cst_26 = arith.constant 0.000000e+00 : f32
    %72 = vector.broadcast %cst_26 : f32 to vector<32x128xf32>
    %73 = arith.maximumf %71, %72 : vector<32x128xf32>
    %74 = arith.truncf %73 : vector<32x128xf32> to vector<32x128xbf16>
    %c0_27 = arith.constant 0 : index
    %c896 = arith.constant 896 : index
    %75 = vector.load %arg1[%c0_27, %c896] : memref<128x1152xbf16, #tpu.memory_space<vmem>>, vector<128x256xbf16>
    %cst_28 = arith.constant dense<0.000000e+00> : vector<32x256xf32>
    %76 = tpu.matmul %74, %75, %cst_28 {dimension_numbers = #tpu.dot_dimension_numbers<[1], [0], [0], [1], [0, 0, 1, 1], [], []>} : vector<32x128xbf16>, vector<128x256xbf16>, vector<32x256xf32> -> vector<32x256xf32>
    %77 = vector.extract_strided_slice %76 {offsets = [0, 0], sizes = [32, 128], strides = [1, 1]} : vector<32x256xf32> to vector<32x128xf32>
    %c2_i32_29 = arith.constant 2 : i32
    %78 = tpu.dynamic_rotate %77 by %c2_i32_29 dim 0 : vector<32x128xf32>, i32 -> vector<32x128xf32>
    %c2_i32_30 = arith.constant 2 : i32
    %79 = vector.broadcast %c2_i32_30 : i32 to vector<32x128xi32>
    %80 = arith.cmpi sge, %17, %79 : vector<32x128xi32>
    %cst_31 = arith.constant 0.000000e+00 : f32
    %81 = vector.broadcast %cst_31 : f32 to vector<32x128xf32>
    %82 = arith.select %80, %78, %81 : vector<32x128xi1>, vector<32x128xf32>
    %83 = vector.extract_strided_slice %76 {offsets = [0, 128], sizes = [32, 128], strides = [1, 1]} : vector<32x256xf32> to vector<32x128xf32>
    %84 = arith.addf %82, %83 : vector<32x128xf32>
    %c4 = arith.constant 4 : index
    %c0_32 = arith.constant 0 : index
    %85 = vector.load %arg2[%c4, %c0_32] : memref<8x128xf32, #tpu.memory_space<vmem>>, vector<1x128xf32>
    %86 = vector.broadcast %85 : vector<1x128xf32> to vector<32x128xf32>
    %87 = arith.addf %84, %86 : vector<32x128xf32>
    %cst_33 = arith.constant 0.000000e+00 : f32
    %88 = vector.broadcast %cst_33 : f32 to vector<32x128xf32>
    %89 = arith.maximumf %87, %88 : vector<32x128xf32>
    %90 = arith.addf %89, %57 : vector<32x128xf32>
    %cst_34 = arith.constant 0.000000e+00 : f32
    %91 = vector.broadcast %cst_34 : f32 to vector<32x128xf32>
    %92 = arith.maximumf %90, %91 : vector<32x128xf32>
    %c0_35 = arith.constant 0 : index
    %c0_36 = arith.constant 0 : index
    %93 = vector.load %arg3[%c0_35, %c0_36] : memref<32x128xf32, #tpu.memory_space<vmem>>, vector<32x128xf32>
    tpu.vector_store %arg3[%c0_35, %c0_36], %92 {strides = array<i32>} : memref<32x128xf32, #tpu.memory_space<vmem>>, vector<32x128xf32>,
    return
  }
}

</mosaic_0001>

<llo_original>
// kernel: tpu_custom_call.1
$region0: #{tpu_custom_call.1}
  #allocation0 [shape = 'u32[]', space=smem, size = 0x4, offset = 0x4, fixed_abs, tag = 'smem constant byte address 0x4 - core index']
  #allocation1 [shape = 'u32[144,128]{1,0:T(1,128)}', space=vmem, size = 0x12000, scoped, tag = 'internal scratch']
  %s0 = inlined_call_operand.hbm [shape: f32[32,128], index: 0, kind: input, shape index: {}]
  %s1 = inlined_call_operand.hbm [shape: bf16[128,1152], index: 1, kind: input, shape index: {}]
  %s2 = inlined_call_operand.hbm [shape: f32[8,128], index: 2, kind: input, shape index: {}]
  %s3 = inlined_call_operand.hbm [shape: f32[32,128], index: 3, kind: output, shape index: {}]
  %s4 = sld [smem:[#allocation0]]
  $region34: #{tpu_custom_call.1} parent=0
    _
  %s6 = ssub.s32 1, %s4
  %s7 = scalar_select 0, %s6, %s4
  $region1: #{tpu_custom_call.1} parent=0
    #allocation2 [shape = 'u8[16384]{0}', space=vmem, size = 0x4000, scoped, tag = 'input window, operand 0, single buffered']
    #allocation3 [shape = 's32[1]{0}', space=sflag, size = 0x4, scoped, tag = 'scoped memory for tpu_custom_call.1']
    #allocation4 [shape = 's32[1]{0}', space=sflag, size = 0x4, scoped, tag = 'scoped memory for tpu_custom_call.1']
    #allocation5 [shape = 'u8[294912]{0}', space=vmem, size = 0x48000, scoped, tag = 'input window, operand 1, single buffered']
    #allocation6 [shape = 's32[1]{0}', space=sflag, size = 0x4, scoped, tag = 'scoped memory for tpu_custom_call.1']
    #allocation7 [shape = 'u8[4096]{0}', space=vmem, size = 0x1000, scoped, tag = 'input window, operand 2, single buffered']
    #allocation8 [shape = 'u8[16384]{0}', space=vmem, size = 0x4000, scoped, tag = 'output window, operand 0, single buffered']
    %8 = vsyncpa [#allocation3], 0
    %9 = vsyncpa [#allocation6], 0
    %10 = vsyncpa [#allocation4], 0
    // Predicated region
    $region2: #{tpu_custom_call.1} parent=1 // pred_check
      _
    $region3: #{tpu_custom_call.1} parent=1 // pred_check_branch
      %12 = sbr.rel (0) target = $region5
    $region4: #{tpu_custom_call.1} parent=1 // pred_region
      %s14 = ssub.s32 512, 512
      %15 = vsyncadd [#allocation3], %s14
      %s16 = sshll.u32 [#allocation2], 4
      %s17 = int_to_ptr.vmem [resolvable:$true] %s16
      %22 = dma.hbm_to_vmem [thread:$0]  %s0, 512, %s17, [#allocation3], 128, 128, 8
    $region5: #{tpu_custom_call.1} parent=1 // pred_fallthru
      _
    // Predicated region
    $region6: #{tpu_custom_call.1} parent=1 // pred_check
      _
    $region7: #{tpu_custom_call.1} parent=1 // pred_check_branch
      %24 = sbr.rel (0) target = $region9
    $region8: #{tpu_custom_call.1} parent=1 // pred_region
      %s26 = ssub.s32 9216, 9216
      %27 = vsyncadd [#allocation6], %s26
      %s28 = sshll.u32 [#allocation5], 4
      %s29 = int_to_ptr.vmem [resolvable:$true] %s28
      %34 = dma.hbm_to_vmem [thread:$0]  %s1, 9216, %s29, [#allocation6], 576, 576, 36
    $region9: #{tpu_custom_call.1} parent=1 // pred_fallthru
      _
    // Predicated region
    $region10: #{tpu_custom_call.1} parent=1 // pred_check
      _
    $region11: #{tpu_custom_call.1} parent=1 // pred_check_branch
      %36 = sbr.rel (0) target = $region13
    $region12: #{tpu_custom_call.1} parent=1 // pred_region
      %s38 = ssub.s32 128, 128
      %39 = vsyncadd [#allocation6], %s38
      %s41 = sshll.u32 [#allocation7], 4
      %s42 = int_to_ptr.vmem [resolvable:$true] %s41
      %44 = dma.hbm_to_vmem [thread:$0]  %s2, 128, %s42, [#allocation6]
    $region13: #{tpu_custom_call.1} parent=1 // pred_fallthru
      _
    // Predicated region
    $region14: #{tpu_custom_call.1} parent=1 // pred_check
      _
    $region15: #{tpu_custom_call.1} parent=1 // pred_check_branch
      %46 = sbr.rel (0) target = $region17
    $region16: #{tpu_custom_call.1} parent=1 // pred_region
      %47 = dma.done [#allocation3], 512
    $region17: #{tpu_custom_call.1} parent=1 // pred_fallthru
      _
    // Predicated region
    $region18: #{tpu_custom_call.1} parent=1 // pred_check
      _
    $region19: #{tpu_custom_call.1} parent=1 // pred_check_branch
      %49 = sbr.rel (0) target = $region21
    $region20: #{tpu_custom_call.1} parent=1 // pred_region
      %50 = dma.done [#allocation6], 9216
    $region21: #{tpu_custom_call.1} parent=1 // pred_fallthru
      _
    // Predicated region
    $region22: #{tpu_custom_call.1} parent=1 // pred_check
      _
    $region23: #{tpu_custom_call.1} parent=1 // pred_check_branch
      %52 = sbr.rel (0) target = $region25
    $region24: #{tpu_custom_call.1} parent=1 // pred_region
      %53 = dma.done [#allocation6], 128
    $region25: #{tpu_custom_call.1} parent=1 // pred_fallthru
      _
    %v55 = vld [vmem:[#allocation2] sm:$0xff]
    %v56 = vld [vmem:[#allocation2 + $0x8] sm:$0xff]
    %v57 = vld [vmem:[#allocation2 + $0x10] sm:$0xff]
    %v58 = vld [vmem:[#allocation2 + $0x18] sm:$0xff]
    %v59 = vlaneseq
    %v60 = vshrl.u32 %v59, 7
    %v61 = vadd.s32 %v60, 8
    %v62 = vadd.s32 %v60, 16
    %v63 = vadd.s32 %v60, 24
    %vm64 = vcmp.lt.s32.totalorder %v60, 0
    %v65 = vsub.s32 0, %v60
    %v66 = vsel %vm64, %v65, %v60
    %v67 = vshrl.u32 %v66, 4
    %v68 = vand.u32 %v66, 15
    %v69 = vsub.s32 0, %v68
    %v70 = vsel %vm64, %v69, %v68
    %vm71 = vcmp.lt.s32.totalorder %v61, 0
    %v72 = vsub.s32 0, %v61
    %v73 = vsel %vm71, %v72, %v61
    %v74 = vshrl.u32 %v73, 4
    %v75 = vand.u32 %v73, 15
    %v76 = vsub.s32 0, %v75
    %v77 = vsel %vm71, %v76, %v75
    %vm78 = vcmp.lt.s32.totalorder %v62, 0
    %v79 = vsub.s32 0, %v62
    %v80 = vsel %vm78, %v79, %v62
    %v81 = vshrl.u32 %v80, 4
    %v82 = vand.u32 %v80, 15
    %v83 = vsub.s32 0, %v82
    %v84 = vsel %vm78, %v83, %v82
    %vm85 = vcmp.lt.s32.totalorder %v63, 0
    %v86 = vsub.s32 0, %v63
    %v87 = vsel %vm85, %v86, %v63
    %v88 = vshrl.u32 %v87, 4
    %v89 = vand.u32 %v87, 15
    %v90 = vsub.s32 0, %v89
    %v91 = vsel %vm85, %v90, %v89
    %vm92 = vcmp.ne.s32.totalorder %v70, 0
    %vm93 = vcmp.ne.s32.totalorder %v77, 0
    %vm94 = vcmp.ne.s32.totalorder %v84, 0
    %vm95 = vcmp.ne.s32.totalorder %v91, 0
    %vm96 = vcmp.lt.s32.totalorder %v70, 0
    %vm97 = vcmp.lt.s32.totalorder %v77, 0
    %vm98 = vcmp.lt.s32.totalorder %v84, 0
    %vm99 = vcmp.lt.s32.totalorder %v91, 0
    %vm100 = vmand %vm96, %vm92
    %vm101 = vmand %vm97, %vm93
    %vm102 = vmand %vm98, %vm94
    %vm103 = vmand %vm99, %vm95
    %v104 = vadd.s32 %v70, 16
    %v105 = vadd.s32 %v77, 16
    %v106 = vadd.s32 %v84, 16
    %v107 = vadd.s32 %v91, 16
    %v108 = vsel %vm100, %v104, %v70
    %v109 = vsel %vm101, %v105, %v77
    %v110 = vsel %vm102, %v106, %v84
    %v111 = vsel %vm103, %v107, %v91
    %v112 = vpack.c.bf16 %v56, %v55
    %v113 = vpack.c.bf16 %v58, %v57
    %v114 = vld [vmem:[#allocation5] sm:$0xff]
    %v115 = vld [vmem:[#allocation5 + $0x8] sm:$0xf]
    %v116 = vld [vmem:[#allocation5 + $0x24] sm:$0xff]
    %v117 = vld [vmem:[#allocation5 + $0x2c] sm:$0xf]
    %v118 = vld [vmem:[#allocation5 + $0x48] sm:$0xff]
    %v119 = vld [vmem:[#allocation5 + $0x50] sm:$0xf]
    %v120 = vld [vmem:[#allocation5 + $0x6c] sm:$0xff]
    %v121 = vld [vmem:[#allocation5 + $0x74] sm:$0xf]
    %v122 = vld [vmem:[#allocation5 + $0x90] sm:$0xff]
    %v123 = vld [vmem:[#allocation5 + $0x98] sm:$0xf]
    %v124 = vld [vmem:[#allocation5 + $0xb4] sm:$0xff]
    %v125 = vld [vmem:[#allocation5 + $0xbc] sm:$0xf]
    %v126 = vld [vmem:[#allocation5 + $0xd8] sm:$0xff]
    %v127 = vld [vmem:[#allocation5 + $0xe0] sm:$0xf]
    %v128 = vld [vmem:[#allocation5 + $0xfc] sm:$0xff]
    %v129 = vld [vmem:[#allocation5 + $0x104] sm:$0xf]
    %v130 = vld [vmem:[#allocation5 + $0x120] sm:$0xff]
    %v131 = vld [vmem:[#allocation5 + $0x128] sm:$0xf]
    %v132 = vld [vmem:[#allocation5 + $0x144] sm:$0xff]
    %v133 = vld [vmem:[#allocation5 + $0x14c] sm:$0xf]
    %v134 = vld [vmem:[#allocation5 + $0x168] sm:$0xff]
    %v135 = vld [vmem:[#allocation5 + $0x170] sm:$0xf]
    %v136 = vld [vmem:[#allocation5 + $0x18c] sm:$0xff]
    %v137 = vld [vmem:[#allocation5 + $0x194] sm:$0xf]
    %v138 = vld [vmem:[#allocation5 + $0x1b0] sm:$0xff]
    %v139 = vld [vmem:[#allocation5 + $0x1b8] sm:$0xf]
    %v140 = vld [vmem:[#allocation5 + $0x1d4] sm:$0xff]
    %v141 = vld [vmem:[#allocation5 + $0x1dc] sm:$0xf]
    %v142 = vld [vmem:[#allocation5 + $0x1f8] sm:$0xff]
    %v143 = vld [vmem:[#allocation5 + $0x200] sm:$0xf]
    %v144 = vld [vmem:[#allocation5 + $0x21c] sm:$0xff]
    %v145 = vld [vmem:[#allocation5 + $0x224] sm:$0xf]
    %v178 = vunpack.c.l.b16 %v114
    %v179 = vunpack.c.h.b16 %v114
    %v180 = vunpack.c.l.b16 %v115
    %v181 = vunpack.c.l.b16 %v116
    %v182 = vunpack.c.h.b16 %v116
    %v183 = vunpack.c.l.b16 %v117
    %v184 = vunpack.c.l.b16 %v118
    %v185 = vunpack.c.h.b16 %v118
    %v186 = vunpack.c.l.b16 %v119
    %v187 = vunpack.c.l.b16 %v120
    %v188 = vunpack.c.h.b16 %v120
    %v189 = vunpack.c.l.b16 %v121
    %v190 = vunpack.c.l.b16 %v122
    %v191 = vunpack.c.h.b16 %v122
    %v192 = vunpack.c.l.b16 %v123
    %v193 = vunpack.c.l.b16 %v124
    %v194 = vunpack.c.h.b16 %v124
    %v195 = vunpack.c.l.b16 %v125
    %v196 = vunpack.c.l.b16 %v126
    %v197 = vunpack.c.h.b16 %v126
    %v198 = vunpack.c.l.b16 %v127
    %v199 = vunpack.c.l.b16 %v128
    %v200 = vunpack.c.h.b16 %v128
    %v201 = vunpack.c.l.b16 %v129
    %v202 = vunpack.c.l.b16 %v130
    %v203 = vunpack.c.h.b16 %v130
    %v204 = vunpack.c.l.b16 %v131
    %v205 = vunpack.c.l.b16 %v132
    %v206 = vunpack.c.h.b16 %v132
    %v207 = vunpack.c.l.b16 %v133
    %v208 = vunpack.c.l.b16 %v134
    %v209 = vunpack.c.h.b16 %v134
    %v210 = vunpack.c.l.b16 %v135
    %v211 = vunpack.c.l.b16 %v136
    %v212 = vunpack.c.h.b16 %v136
    %v213 = vunpack.c.l.b16 %v137
    %v214 = vunpack.c.l.b16 %v138
    %v215 = vunpack.c.h.b16 %v138
    %v216 = vunpack.c.l.b16 %v139
    %v217 = vunpack.c.l.b16 %v140
    %v218 = vunpack.c.h.b16 %v140
    %v219 = vunpack.c.l.b16 %v141
    %v220 = vunpack.c.l.b16 %v142
    %v221 = vunpack.c.h.b16 %v142
    %v222 = vunpack.c.l.b16 %v143
    %v223 = vunpack.c.l.b16 %v144
    %v224 = vunpack.c.h.b16 %v144
    %v225 = vunpack.c.l.b16 %v145
    %v226 = vpack.c.b16 %v181, %v178
    %v227 = vpack.c.b16 %v182, %v179
    %v228 = vpack.c.b16 %v183, %v180
    %v229 = vpack.c.b16 %v187, %v184
    %v230 = vpack.c.b16 %v188, %v185
    %v231 = vpack.c.b16 %v189, %v186
    %v232 = vpack.c.b16 %v193, %v190
    %v233 = vpack.c.b16 %v194, %v191
    %v234 = vpack.c.b16 %v195, %v192
    %v235 = vpack.c.b16 %v199, %v196
    %v236 = vpack.c.b16 %v200, %v197
    %v237 = vpack.c.b16 %v201, %v198
    %v238 = vpack.c.b16 %v205, %v202
    %v239 = vpack.c.b16 %v206, %v203
    %v240 = vpack.c.b16 %v207, %v204
    %v241 = vpack.c.b16 %v211, %v208
    %v242 = vpack.c.b16 %v212, %v209
    %v243 = vpack.c.b16 %v213, %v210
    %v244 = vpack.c.b16 %v217, %v214
    %v245 = vpack.c.b16 %v218, %v215
    %v246 = vpack.c.b16 %v219, %v216
    %v247 = vpack.c.b16 %v223, %v220
    %v248 = vpack.c.b16 %v224, %v221
    %v249 = vpack.c.b16 %v225, %v222
    %274 = vmatprep.subr.bf16.mxu0 %v227
    %275 = vmatpush1.bf16.msra.mxu0 %v226
    %276 = vmatprep.subr.bf16.mxu0 %v230
    %277 = vmatpush1.bf16.msra.mxu0 %v229
    %278 = vmatprep.subr.bf16.mxu0 %v233
    %279 = vmatpush1.bf16.msra.mxu0 %v232
    %280 = vmatprep.subr.bf16.mxu0 %v236
    %281 = vmatpush1.bf16.msra.mxu0 %v235
    %282 = vmatprep.subr.bf16.mxu0 %v239
    %283 = vmatpush1.bf16.msra.mxu0 %v238
    %284 = vmatprep.subr.bf16.mxu0 %v242
    %285 = vmatpush1.bf16.msra.mxu0 %v241
    %286 = vmatprep.subr.bf16.mxu0 %v245
    %287 = vmatpush1.bf16.msra.mxu0 %v244
    %288 = vmatprep.subr.bf16.mxu0 %v248
    %289 = vmatpush1.bf16.msra.mxu0 %v247
    %290 = vmatprep.subr.bf16.mxu0 0
    %291 = vmatpush1.bf16.msra.mxu0 0
    %292 = vmatprep.subr.bf16.mxu0 0
    %293 = vmatpush1.bf16.msra.mxu0 0
    %294 = vmatprep.subr.bf16.mxu0 0
    %295 = vmatpush1.bf16.msra.mxu0 0
    %296 = vmatprep.subr.bf16.mxu0 0
    %297 = vmatpush1.bf16.msra.mxu0 0
    %298 = vmatprep.subr.bf16.mxu0 0
    %299 = vmatpush1.bf16.msra.mxu0 0
    %300 = vmatprep.subr.bf16.mxu0 0
    %301 = vmatpush1.bf16.msra.mxu0 0
    %302 = vmatprep.subr.bf16.mxu0 0
    %303 = vmatpush1.bf16.msra.mxu0 0
    %304 = vmatprep.subr.bf16.mxu0 0
    %305 = vmatpush1.bf16.msra.mxu0 0
    %306 = vmatprep.mubr.bf16.mxu0 0
    %307 = vmatmul.mubr.bf16.gmra.mrb[0].mxu0 %v112
    %v308 = vpop.f32.mrb[0].mxu0
    %v309 = vadd.f32 0.0, %v308
    %v310 = vpop.f32.mrb[0].mxu0
    %v311 = vadd.f32 0.0, %v310
    %v312 = vpop.f32.mrb[0].mxu0
    %v313 = vadd.f32 0.0, %v312
    %v314 = vpop.f32.mrb[0].mxu0
    %v315 = vadd.f32 0.0, %v314
    %316 = vmatprep.mubr.bf16.mxu0 0
    %317 = vmatmul.mubr.bf16.gmra.mrb[0].mxu0 %v113
    %v318 = vpop.f32.mrb[0].mxu0
    %v319 = vadd.f32 0.0, %v318
    %v320 = vpop.f32.mrb[0].mxu0
    %v321 = vadd.f32 0.0, %v320
    %v322 = vpop.f32.mrb[0].mxu0
    %v323 = vadd.f32 0.0, %v322
    %v324 = vpop.f32.mrb[0].mxu0
    %v325 = vadd.f32 0.0, %v324
    %326 = vdwg.mxu0
    %327 = vmatprep.subr.bf16.mxu0 0
    %328 = vmatpush1.bf16.msra.mxu0 %v228
    %329 = vmatprep.subr.bf16.mxu0 0
    %330 = vmatpush1.bf16.msra.mxu0 %v231
    %331 = vmatprep.subr.bf16.mxu0 0
    %332 = vmatpush1.bf16.msra.mxu0 %v234
    %333 = vmatprep.subr.bf16.mxu0 0
    %334 = vmatpush1.bf16.msra.mxu0 %v237
    %335 = vmatprep.subr.bf16.mxu0 0
    %336 = vmatpush1.bf16.msra.mxu0 %v240
    %337 = vmatprep.subr.bf16.mxu0 0
    %338 = vmatpush1.bf16.msra.mxu0 %v243
    %339 = vmatprep.subr.bf16.mxu0 0
    %340 = vmatpush1.bf16.msra.mxu0 %v246
    %341 = vmatprep.subr.bf16.mxu0 0
    %342 = vmatpush1.bf16.msra.mxu0 %v249
    %343 = vmatprep.subr.bf16.mxu0 0
    %344 = vmatpush1.bf16.msra.mxu0 0
    %345 = vmatprep.subr.bf16.mxu0 0
    %346 = vmatpush1.bf16.msra.mxu0 0
    %347 = vmatprep.subr.bf16.mxu0 0
    %348 = vmatpush1.bf16.msra.mxu0 0
    %349 = vmatprep.subr.bf16.mxu0 0
    %350 = vmatpush1.bf16.msra.mxu0 0
    %351 = vmatprep.subr.bf16.mxu0 0
    %352 = vmatpush1.bf16.msra.mxu0 0
    %353 = vmatprep.subr.bf16.mxu0 0
    %354 = vmatpush1.bf16.msra.mxu0 0
    %355 = vmatprep.subr.bf16.mxu0 0
    %356 = vmatpush1.bf16.msra.mxu0 0
    %357 = vmatprep.subr.bf16.mxu0 0
    %358 = vmatpush1.bf16.msra.mxu0 0
    %359 = vmatprep.mubr.bf16.mxu0 0
    %360 = vmatmul.mubr.bf16.gmra.mrb[0].mxu0 %v112
    %v361 = vpop.f32.mrb[0].mxu0
    %v362 = vadd.f32 0.0, %v361
    %v363 = vpop.f32.mrb[0].mxu0
    %v364 = vpop.f32.mrb[0].mxu0
    %v365 = vadd.f32 0.0, %v364
    %v366 = vpop.f32.mrb[0].mxu0
    %367 = vmatprep.mubr.bf16.mxu0 0
    %368 = vmatmul.mubr.bf16.gmra.mrb[0].mxu0 %v113
    %v369 = vpop.f32.mrb[0].mxu0
    %v370 = vadd.f32 0.0, %v369
    %v371 = vpop.f32.mrb[0].mxu0
    %v372 = vpop.f32.mrb[0].mxu0
    %v373 = vadd.f32 0.0, %v372
    %v374 = vpop.f32.mrb[0].mxu0
    %375 = vdwg.mxu0
    %v376 = vrot.slane %v309, 7
    %v377 = vrot.slane %v313, 7
    %v378 = vrot.slane %v319, 7
    %v379 = vrot.slane %v323, 7
    %vm380 = vcmp.lt.s32.totalorder %v60, 1
    %v381 = vsel %vm380, %v378, %v379
    %v382 = vsel %vm380, %v377, %v378
    %v383 = vsel %vm380, %v376, %v377
    %v384 = vsel %vm380, %v379, %v376
    %vm385 = vcmp.ge.s32.totalorder %v108, 1
    %vm386 = vcmp.ge.s32.totalorder %v109, 1
    %vm387 = vcmp.ge.s32.totalorder %v110, 1
    %vm388 = vcmp.ge.s32.totalorder %v111, 1
    %v389 = vsel %vm385, %v384, 0.0
    %v390 = vsel %vm386, %v383, 0.0
    %v391 = vsel %vm387, %v382, 0.0
    %v392 = vsel %vm388, %v381, 0.0
    %v393 = vadd.f32 %v389, %v311
    %v394 = vadd.f32 %v390, %v315
    %v395 = vadd.f32 %v391, %v321
    %v396 = vadd.f32 %v392, %v325
    %v397 = vld [vmem:[#allocation7] sm:$0x1]
    %v398 = vlaneseq
    %v399 = vshrl.u32 %v398, 7
    %v400 = vsub.s32 0, %v399
    %v401 = vrot.slane %v397, %v400
    %v402 = vadd.f32 %v393, %v401
    %v403 = vadd.f32 %v394, %v401
    %v404 = vadd.f32 %v395, %v401
    %v405 = vadd.f32 %v396, %v401
    %v406 = vmax.f32 %v402, 0.0
    %v407 = vmax.f32 %v403, 0.0
    %v408 = vmax.f32 %v404, 0.0
    %v409 = vmax.f32 %v405, 0.0
    %v410 = vld [vmem:[#allocation7 + $0x1] sm:$0x1]
    %v411 = vlaneseq
    %v412 = vshrl.u32 %v411, 7
    %v413 = vsub.s32 0, %v412
    %v414 = vrot.slane %v410, %v413
    %v415 = vadd.f32 %v362, %v414
    %v416 = vadd.f32 %v365, %v414
    %v417 = vadd.f32 %v370, %v414
    %v418 = vadd.f32 %v373, %v414
    %v419 = vpack.c.bf16 %v407, %v406
    %v420 = vpack.c.bf16 %v409, %v408
    %v421 = vld [vmem:[#allocation5 + $0xc] sm:$0xff]
    %v422 = vld [vmem:[#allocation5 + $0x30] sm:$0xff]
    %v423 = vld [vmem:[#allocation5 + $0x54] sm:$0xff]
    %v424 = vld [vmem:[#allocation5 + $0x78] sm:$0xff]
    %v425 = vld [vmem:[#allocation5 + $0x9c] sm:$0xff]
    %v426 = vld [vmem:[#allocation5 + $0xc0] sm:$0xff]
    %v427 = vld [vmem:[#allocation5 + $0xe4] sm:$0xff]
    %v428 = vld [vmem:[#allocation5 + $0x108] sm:$0xff]
    %v429 = vld [vmem:[#allocation5 + $0x12c] sm:$0xff]
    %v430 = vld [vmem:[#allocation5 + $0x150] sm:$0xff]
    %v431 = vld [vmem:[#allocation5 + $0x174] sm:$0xff]
    %v432 = vld [vmem:[#allocation5 + $0x198] sm:$0xff]
    %v433 = vld [vmem:[#allocation5 + $0x1bc] sm:$0xff]
    %v434 = vld [vmem:[#allocation5 + $0x1e0] sm:$0xff]
    %v435 = vld [vmem:[#allocation5 + $0x204] sm:$0xff]
    %v436 = vld [vmem:[#allocation5 + $0x228] sm:$0xff]
    %v453 = vunpack.c.l.b16 %v421
    %v454 = vunpack.c.h.b16 %v421
    %v455 = vunpack.c.l.b16 %v422
    %v456 = vunpack.c.h.b16 %v422
    %v457 = vunpack.c.l.b16 %v423
    %v458 = vunpack.c.h.b16 %v423
    %v459 = vunpack.c.l.b16 %v424
    %v460 = vunpack.c.h.b16 %v424
    %v461 = vunpack.c.l.b16 %v425
    %v462 = vunpack.c.h.b16 %v425
    %v463 = vunpack.c.l.b16 %v426
    %v464 = vunpack.c.h.b16 %v426
    %v465 = vunpack.c.l.b16 %v427
    %v466 = vunpack.c.h.b16 %v427
    %v467 = vunpack.c.l.b16 %v428
    %v468 = vunpack.c.h.b16 %v428
    %v469 = vunpack.c.l.b16 %v429
    %v470 = vunpack.c.h.b16 %v429
    %v471 = vunpack.c.l.b16 %v430
    %v472 = vunpack.c.h.b16 %v430
    %v473 = vunpack.c.l.b16 %v431
    %v474 = vunpack.c.h.b16 %v431
    %v475 = vunpack.c.l.b16 %v432
    %v476 = vunpack.c.h.b16 %v432
    %v477 = vunpack.c.l.b16 %v433
    %v478 = vunpack.c.h.b16 %v433
    %v479 = vunpack.c.l.b16 %v434
    %v480 = vunpack.c.h.b16 %v434
    %v481 = vunpack.c.l.b16 %v435
    %v482 = vunpack.c.h.b16 %v435
    %v483 = vunpack.c.l.b16 %v436
    %v484 = vunpack.c.h.b16 %v436
    %v485 = vpack.c.b16 %v455, %v453
    %v486 = vpack.c.b16 %v456, %v454
    %v487 = vpack.c.b16 %v459, %v457
    %v488 = vpack.c.b16 %v460, %v458
    %v489 = vpack.c.b16 %v463, %v461
    %v490 = vpack.c.b16 %v464, %v462
    %v491 = vpack.c.b16 %v467, %v465
    %v492 = vpack.c.b16 %v468, %v466
    %v493 = vpack.c.b16 %v471, %v469
    %v494 = vpack.c.b16 %v472, %v470
    %v495 = vpack.c.b16 %v475, %v473
    %v496 = vpack.c.b16 %v476, %v474
    %v497 = vpack.c.b16 %v479, %v477
    %v498 = vpack.c.b16 %v480, %v478
    %v499 = vpack.c.b16 %v483, %v481
    %v500 = vpack.c.b16 %v484, %v482
    %517 = vmatprep.subr.bf16.mxu0 %v486
    %518 = vmatpush1.bf16.msra.mxu0 %v485
    %519 = vmatprep.subr.bf16.mxu0 %v488
    %520 = vmatpush1.bf16.msra.mxu0 %v487
    %521 = vmatprep.subr.bf16.mxu0 %v490
    %522 = vmatpush1.bf16.msra.mxu0 %v489
    %523 = vmatprep.subr.bf16.mxu0 %v492
    %524 = vmatpush1.bf16.msra.mxu0 %v491
    %525 = vmatprep.subr.bf16.mxu0 %v494
    %526 = vmatpush1.bf16.msra.mxu0 %v493
    %527 = vmatprep.subr.bf16.mxu0 %v496
    %528 = vmatpush1.bf16.msra.mxu0 %v495
    %529 = vmatprep.subr.bf16.mxu0 %v498
    %530 = vmatpush1.bf16.msra.mxu0 %v497
    %531 = vmatprep.subr.bf16.mxu0 %v500
    %532 = vmatpush1.bf16.msra.mxu0 %v499
    %533 = vmatprep.subr.bf16.mxu0 0
    %534 = vmatpush1.bf16.msra.mxu0 0
    %535 = vmatprep.subr.bf16.mxu0 0
    %536 = vmatpush1.bf16.msra.mxu0 0
    %537 = vmatprep.subr.bf16.mxu0 0
    %538 = vmatpush1.bf16.msra.mxu0 0
    %539 = vmatprep.subr.bf16.mxu0 0
    %540 = vmatpush1.bf16.msra.mxu0 0
    %541 = vmatprep.subr.bf16.mxu0 0
    %542 = vmatpush1.bf16.msra.mxu0 0
    %543 = vmatprep.subr.bf16.mxu0 0
    %544 = vmatpush1.bf16.msra.mxu0 0
    %545 = vmatprep.subr.bf16.mxu0 0
    %546 = vmatpush1.bf16.msra.mxu0 0
    %547 = vmatprep.subr.bf16.mxu0 0
    %548 = vmatpush1.bf16.msra.mxu0 0
    %549 = vmatprep.mubr.bf16.mxu0 0
    %550 = vmatmul.mubr.bf16.gmra.mrb[0].mxu0 %v419
    %v551 = vpop.f32.mrb[0].mxu0
    %v552 = vadd.f32 0.0, %v551
    %v553 = vpop.f32.mrb[0].mxu0
    %v554 = vadd.f32 0.0, %v553
    %v555 = vpop.f32.mrb[0].mxu0
    %v556 = vadd.f32 0.0, %v555
    %v557 = vpop.f32.mrb[0].mxu0
    %v558 = vadd.f32 0.0, %v557
    %559 = vmatprep.mubr.bf16.mxu0 0
    %560 = vmatmul.mubr.bf16.gmra.mrb[0].mxu0 %v420
    %v561 = vpop.f32.mrb[0].mxu0
    %v562 = vadd.f32 0.0, %v561
    %v563 = vpop.f32.mrb[0].mxu0
    %v564 = vadd.f32 0.0, %v563
    %v565 = vpop.f32.mrb[0].mxu0
    %v566 = vadd.f32 0.0, %v565
    %v567 = vpop.f32.mrb[0].mxu0
    %v568 = vadd.f32 0.0, %v567
    %569 = vdwg.mxu0
    %v570 = vrot.slane %v552, 7
    %v571 = vrot.slane %v556, 7
    %v572 = vrot.slane %v562, 7
    %v573 = vrot.slane %v566, 7
    %v574 = vsel %vm380, %v572, %v573
    %v575 = vsel %vm380, %v571, %v572
    %v576 = vsel %vm380, %v570, %v571
    %v577 = vsel %vm380, %v573, %v570
    %v578 = vsel %vm385, %v577, 0.0
    %v579 = vsel %vm386, %v576, 0.0
    %v580 = vsel %vm387, %v575, 0.0
    %v581 = vsel %vm388, %v574, 0.0
    %v582 = vadd.f32 %v578, %v554
    %v583 = vadd.f32 %v579, %v558
    %v584 = vadd.f32 %v580, %v564
    %v585 = vadd.f32 %v581, %v568
    %v586 = vld [vmem:[#allocation7 + $0x2] sm:$0x1]
    %v587 = vlaneseq
    %v588 = vshrl.u32 %v587, 7
    %v589 = vsub.s32 0, %v588
    %v590 = vrot.slane %v586, %v589
    %v591 = vadd.f32 %v582, %v590
    %v592 = vadd.f32 %v583, %v590
    %v593 = vadd.f32 %v584, %v590
    %v594 = vadd.f32 %v585, %v590
    %v595 = vmax.f32 %v591, 0.0
    %v596 = vmax.f32 %v592, 0.0
    %v597 = vmax.f32 %v593, 0.0
    %v598 = vmax.f32 %v594, 0.0
    %v599 = vadd.f32 %v595, %v415
    %v600 = vadd.f32 %v596, %v416
    %v601 = vadd.f32 %v597, %v417
    %v602 = vadd.f32 %v598, %v418
    %v603 = vmax.f32 %v599, 0.0
    %v604 = vmax.f32 %v600, 0.0
    %v605 = vmax.f32 %v601, 0.0
    %v606 = vmax.f32 %v602, 0.0
    %v607 = vpack.c.bf16 %v604, %v603
    %v608 = vpack.c.bf16 %v606, %v605
    %v609 = vld [vmem:[#allocation5 + $0x14] sm:$0xff]
    %v610 = vld [vmem:[#allocation5 + $0x38] sm:$0xff]
    %v611 = vld [vmem:[#allocation5 + $0x5c] sm:$0xff]
    %v612 = vld [vmem:[#allocation5 + $0x80] sm:$0xff]
    %v613 = vld [vmem:[#allocation5 + $0xa4] sm:$0xff]
    %v614 = vld [vmem:[#allocation5 + $0xc8] sm:$0xff]
    %v615 = vld [vmem:[#allocation5 + $0xec] sm:$0xff]
    %v616 = vld [vmem:[#allocation5 + $0x110] sm:$0xff]
    %v617 = vld [vmem:[#allocation5 + $0x134] sm:$0xff]
    %v618 = vld [vmem:[#allocation5 + $0x158] sm:$0xff]
    %v619 = vld [vmem:[#allocation5 + $0x17c] sm:$0xff]
    %v620 = vld [vmem:[#allocation5 + $0x1a0] sm:$0xff]
    %v621 = vld [vmem:[#allocation5 + $0x1c4] sm:$0xff]
    %v622 = vld [vmem:[#allocation5 + $0x1e8] sm:$0xff]
    %v623 = vld [vmem:[#allocation5 + $0x20c] sm:$0xff]
    %v624 = vld [vmem:[#allocation5 + $0x230] sm:$0xff]
    %v641 = vunpack.c.l.b16 %v609
    %v642 = vunpack.c.h.b16 %v609
    %v643 = vunpack.c.l.b16 %v610
    %v644 = vunpack.c.h.b16 %v610
    %v645 = vunpack.c.l.b16 %v611
    %v646 = vunpack.c.h.b16 %v611
    %v647 = vunpack.c.l.b16 %v612
    %v648 = vunpack.c.h.b16 %v612
    %v649 = vunpack.c.l.b16 %v613
    %v650 = vunpack.c.h.b16 %v613
    %v651 = vunpack.c.l.b16 %v614
    %v652 = vunpack.c.h.b16 %v614
    %v653 = vunpack.c.l.b16 %v615
    %v654 = vunpack.c.h.b16 %v615
    %v655 = vunpack.c.l.b16 %v616
    %v656 = vunpack.c.h.b16 %v616
    %v657 = vunpack.c.l.b16 %v617
    %v658 = vunpack.c.h.b16 %v617
    %v659 = vunpack.c.l.b16 %v618
    %v660 = vunpack.c.h.b16 %v618
    %v661 = vunpack.c.l.b16 %v619
    %v662 = vunpack.c.h.b16 %v619
    %v663 = vunpack.c.l.b16 %v620
    %v664 = vunpack.c.h.b16 %v620
    %v665 = vunpack.c.l.b16 %v621
    %v666 = vunpack.c.h.b16 %v621
    %v667 = vunpack.c.l.b16 %v622
    %v668 = vunpack.c.h.b16 %v622
    %v669 = vunpack.c.l.b16 %v623
    %v670 = vunpack.c.h.b16 %v623
    %v671 = vunpack.c.l.b16 %v624
    %v672 = vunpack.c.h.b16 %v624
    %v673 = vpack.c.b16 %v643, %v641
    %v674 = vpack.c.b16 %v644, %v642
    %v675 = vpack.c.b16 %v647, %v645
    %v676 = vpack.c.b16 %v648, %v646
    %v677 = vpack.c.b16 %v651, %v649
    %v678 = vpack.c.b16 %v652, %v650
    %v679 = vpack.c.b16 %v655, %v653
    %v680 = vpack.c.b16 %v656, %v654
    %v681 = vpack.c.b16 %v659, %v657
    %v682 = vpack.c.b16 %v660, %v658
    %v683 = vpack.c.b16 %v663, %v661
    %v684 = vpack.c.b16 %v664, %v662
    %v685 = vpack.c.b16 %v667, %v665
    %v686 = vpack.c.b16 %v668, %v666
    %v687 = vpack.c.b16 %v671, %v669
    %v688 = vpack.c.b16 %v672, %v670
    %705 = vmatprep.subr.bf16.mxu0 %v674
    %706 = vmatpush1.bf16.msra.mxu0 %v673
    %707 = vmatprep.subr.bf16.mxu0 %v676
    %708 = vmatpush1.bf16.msra.mxu0 %v675
    %709 = vmatprep.subr.bf16.mxu0 %v678
    %710 = vmatpush1.bf16.msra.mxu0 %v677
    %711 = vmatprep.subr.bf16.mxu0 %v680
    %712 = vmatpush1.bf16.msra.mxu0 %v679
    %713 = vmatprep.subr.bf16.mxu0 %v682
    %714 = vmatpush1.bf16.msra.mxu0 %v681
    %715 = vmatprep.subr.bf16.mxu0 %v684
    %716 = vmatpush1.bf16.msra.mxu0 %v683
    %717 = vmatprep.subr.bf16.mxu0 %v686
    %718 = vmatpush1.bf16.msra.mxu0 %v685
    %719 = vmatprep.subr.bf16.mxu0 %v688
    %720 = vmatpush1.bf16.msra.mxu0 %v687
    %721 = vmatprep.subr.bf16.mxu0 0
    %722 = vmatpush1.bf16.msra.mxu0 0
    %723 = vmatprep.subr.bf16.mxu0 0
    %724 = vmatpush1.bf16.msra.mxu0 0
    %725 = vmatprep.subr.bf16.mxu0 0
    %726 = vmatpush1.bf16.msra.mxu0 0
    %727 = vmatprep.subr.bf16.mxu0 0
    %728 = vmatpush1.bf16.msra.mxu0 0
    %729 = vmatprep.subr.bf16.mxu0 0
    %730 = vmatpush1.bf16.msra.mxu0 0
    %731 = vmatprep.subr.bf16.mxu0 0
    %732 = vmatpush1.bf16.msra.mxu0 0
    %733 = vmatprep.subr.bf16.mxu0 0
    %734 = vmatpush1.bf16.msra.mxu0 0
    %735 = vmatprep.subr.bf16.mxu0 0
    %736 = vmatpush1.bf16.msra.mxu0 0
    %737 = vmatprep.mubr.bf16.mxu0 0
    %738 = vmatmul.mubr.bf16.gmra.mrb[0].mxu0 %v607
    %v739 = vpop.f32.mrb[0].mxu0
    %v740 = vadd.f32 0.0, %v739
    %v741 = vpop.f32.mrb[0].mxu0
    %v742 = vadd.f32 0.0, %v741
    %v743 = vpop.f32.mrb[0].mxu0
    %v744 = vadd.f32 0.0, %v743
    %v745 = vpop.f32.mrb[0].mxu0
    %v746 = vadd.f32 0.0, %v745
    %747 = vmatprep.mubr.bf16.mxu0 0
    %748 = vmatmul.mubr.bf16.gmra.mrb[0].mxu0 %v608
    %v749 = vpop.f32.mrb[0].mxu0
    %v750 = vadd.f32 0.0, %v749
    %v751 = vpop.f32.mrb[0].mxu0
    %v752 = vadd.f32 0.0, %v751
    %v753 = vpop.f32.mrb[0].mxu0
    %v754 = vadd.f32 0.0, %v753
    %v755 = vpop.f32.mrb[0].mxu0
    %v756 = vadd.f32 0.0, %v755
    %757 = vdwg.mxu0
    %v758 = vrot.slane %v740, 6
    %v759 = vrot.slane %v744, 6
    %v760 = vrot.slane %v750, 6
    %v761 = vrot.slane %v754, 6
    %vm762 = vcmp.lt.s32.totalorder %v60, 2
    %v763 = vsel %vm762, %v760, %v761
    %v764 = vsel %vm762, %v759, %v760
    %v765 = vsel %vm762, %v758, %v759
    %v766 = vsel %vm762, %v761, %v758
    %vm767 = vcmp.ge.s32.totalorder %v108, 2
    %vm768 = vcmp.ge.s32.totalorder %v109, 2
    %vm769 = vcmp.ge.s32.totalorder %v110, 2
    %vm770 = vcmp.ge.s32.totalorder %v111, 2
    %v771 = vsel %vm767, %v766, 0.0
    %v772 = vsel %vm768, %v765, 0.0
    %v773 = vsel %vm769, %v764, 0.0
    %v774 = vsel %vm770, %v763, 0.0
    %v775 = vadd.f32 %v771, %v742
    %v776 = vadd.f32 %v772, %v746
    %v777 = vadd.f32 %v773, %v752
    %v778 = vadd.f32 %v774, %v756
    %v779 = vld [vmem:[#allocation7 + $0x3] sm:$0x1]
    %v780 = vlaneseq
    %v781 = vshrl.u32 %v780, 7
    %v782 = vsub.s32 0, %v781
    %v783 = vrot.slane %v779, %v782
    %v784 = vadd.f32 %v775, %v783
    %v785 = vadd.f32 %v776, %v783
    %v786 = vadd.f32 %v777, %v783
    %v787 = vadd.f32 %v778, %v783
    %v788 = vmax.f32 %v784, 0.0
    %v789 = vmax.f32 %v785, 0.0
    %v790 = vmax.f32 %v786, 0.0
    %v791 = vmax.f32 %v787, 0.0
    %v792 = vpack.c.bf16 %v789, %v788
    %v793 = vpack.c.bf16 %v791, %v790
    %v794 = vld [vmem:[#allocation5 + $0x1c] sm:$0xff]
    %v795 = vld [vmem:[#allocation5 + $0x40] sm:$0xff]
    %v796 = vld [vmem:[#allocation5 + $0x64] sm:$0xff]
    %v797 = vld [vmem:[#allocation5 + $0x88] sm:$0xff]
    %v798 = vld [vmem:[#allocation5 + $0xac] sm:$0xff]
    %v799 = vld [vmem:[#allocation5 + $0xd0] sm:$0xff]
    %v800 = vld [vmem:[#allocation5 + $0xf4] sm:$0xff]
    %v801 = vld [vmem:[#allocation5 + $0x118] sm:$0xff]
    %v802 = vld [vmem:[#allocation5 + $0x13c] sm:$0xff]
    %v803 = vld [vmem:[#allocation5 + $0x160] sm:$0xff]
    %v804 = vld [vmem:[#allocation5 + $0x184] sm:$0xff]
    %v805 = vld [vmem:[#allocation5 + $0x1a8] sm:$0xff]
    %v806 = vld [vmem:[#allocation5 + $0x1cc] sm:$0xff]
    %v807 = vld [vmem:[#allocation5 + $0x1f0] sm:$0xff]
    %v808 = vld [vmem:[#allocation5 + $0x214] sm:$0xff]
    %v809 = vld [vmem:[#allocation5 + $0x238] sm:$0xff]
    %v826 = vunpack.c.l.b16 %v794
    %v827 = vunpack.c.h.b16 %v794
    %v828 = vunpack.c.l.b16 %v795
    %v829 = vunpack.c.h.b16 %v795
    %v830 = vunpack.c.l.b16 %v796
    %v831 = vunpack.c.h.b16 %v796
    %v832 = vunpack.c.l.b16 %v797
    %v833 = vunpack.c.h.b16 %v797
    %v834 = vunpack.c.l.b16 %v798
    %v835 = vunpack.c.h.b16 %v798
    %v836 = vunpack.c.l.b16 %v799
    %v837 = vunpack.c.h.b16 %v799
    %v838 = vunpack.c.l.b16 %v800
    %v839 = vunpack.c.h.b16 %v800
    %v840 = vunpack.c.l.b16 %v801
    %v841 = vunpack.c.h.b16 %v801
    %v842 = vunpack.c.l.b16 %v802
    %v843 = vunpack.c.h.b16 %v802
    %v844 = vunpack.c.l.b16 %v803
    %v845 = vunpack.c.h.b16 %v803
    %v846 = vunpack.c.l.b16 %v804
    %v847 = vunpack.c.h.b16 %v804
    %v848 = vunpack.c.l.b16 %v805
    %v849 = vunpack.c.h.b16 %v805
    %v850 = vunpack.c.l.b16 %v806
    %v851 = vunpack.c.h.b16 %v806
    %v852 = vunpack.c.l.b16 %v807
    %v853 = vunpack.c.h.b16 %v807
    %v854 = vunpack.c.l.b16 %v808
    %v855 = vunpack.c.h.b16 %v808
    %v856 = vunpack.c.l.b16 %v809
    %v857 = vunpack.c.h.b16 %v809
    %v858 = vpack.c.b16 %v828, %v826
    %v859 = vpack.c.b16 %v829, %v827
    %v860 = vpack.c.b16 %v832, %v830
    %v861 = vpack.c.b16 %v833, %v831
    %v862 = vpack.c.b16 %v836, %v834
    %v863 = vpack.c.b16 %v837, %v835
    %v864 = vpack.c.b16 %v840, %v838
    %v865 = vpack.c.b16 %v841, %v839
    %v866 = vpack.c.b16 %v844, %v842
    %v867 = vpack.c.b16 %v845, %v843
    %v868 = vpack.c.b16 %v848, %v846
    %v869 = vpack.c.b16 %v849, %v847
    %v870 = vpack.c.b16 %v852, %v850
    %v871 = vpack.c.b16 %v853, %v851
    %v872 = vpack.c.b16 %v856, %v854
    %v873 = vpack.c.b16 %v857, %v855
    %890 = vmatprep.subr.bf16.mxu0 %v859
    %891 = vmatpush1.bf16.msra.mxu0 %v858
    %892 = vmatprep.subr.bf16.mxu0 %v861
    %893 = vmatpush1.bf16.msra.mxu0 %v860
    %894 = vmatprep.subr.bf16.mxu0 %v863
    %895 = vmatpush1.bf16.msra.mxu0 %v862
    %896 = vmatprep.subr.bf16.mxu0 %v865
    %897 = vmatpush1.bf16.msra.mxu0 %v864
    %898 = vmatprep.subr.bf16.mxu0 %v867
    %899 = vmatpush1.bf16.msra.mxu0 %v866
    %900 = vmatprep.subr.bf16.mxu0 %v869
    %901 = vmatpush1.bf16.msra.mxu0 %v868
    %902 = vmatprep.subr.bf16.mxu0 %v871
    %903 = vmatpush1.bf16.msra.mxu0 %v870
    %904 = vmatprep.subr.bf16.mxu0 %v873
    %905 = vmatpush1.bf16.msra.mxu0 %v872
    %906 = vmatprep.subr.bf16.mxu0 0
    %907 = vmatpush1.bf16.msra.mxu0 0
    %908 = vmatprep.subr.bf16.mxu0 0
    %909 = vmatpush1.bf16.msra.mxu0 0
    %910 = vmatprep.subr.bf16.mxu0 0
    %911 = vmatpush1.bf16.msra.mxu0 0
    %912 = vmatprep.subr.bf16.mxu0 0
    %913 = vmatpush1.bf16.msra.mxu0 0
    %914 = vmatprep.subr.bf16.mxu0 0
    %915 = vmatpush1.bf16.msra.mxu0 0
    %916 = vmatprep.subr.bf16.mxu0 0
    %917 = vmatpush1.bf16.msra.mxu0 0
    %918 = vmatprep.subr.bf16.mxu0 0
    %919 = vmatpush1.bf16.msra.mxu0 0
    %920 = vmatprep.subr.bf16.mxu0 0
    %921 = vmatpush1.bf16.msra.mxu0 0
    %922 = vmatprep.mubr.bf16.mxu0 0
    %923 = vmatmul.mubr.bf16.gmra.mrb[0].mxu0 %v792
    %v924 = vpop.f32.mrb[0].mxu0
    %v925 = vadd.f32 0.0, %v924
    %v926 = vpop.f32.mrb[0].mxu0
    %v927 = vadd.f32 0.0, %v926
    %v928 = vpop.f32.mrb[0].mxu0
    %v929 = vadd.f32 0.0, %v928
    %v930 = vpop.f32.mrb[0].mxu0
    %v931 = vadd.f32 0.0, %v930
    %932 = vmatprep.mubr.bf16.mxu0 0
    %933 = vmatmul.mubr.bf16.gmra.mrb[0].mxu0 %v793
    %v934 = vpop.f32.mrb[0].mxu0
    %v935 = vadd.f32 0.0, %v934
    %v936 = vpop.f32.mrb[0].mxu0
    %v937 = vadd.f32 0.0, %v936
    %v938 = vpop.f32.mrb[0].mxu0
    %v939 = vadd.f32 0.0, %v938
    %v940 = vpop.f32.mrb[0].mxu0
    %v941 = vadd.f32 0.0, %v940
    %942 = vdwg.mxu0
    %v943 = vrot.slane %v925, 6
    %v944 = vrot.slane %v929, 6
    %v945 = vrot.slane %v935, 6
    %v946 = vrot.slane %v939, 6
    %v947 = vsel %vm762, %v945, %v946
    %v948 = vsel %vm762, %v944, %v945
    %v949 = vsel %vm762, %v943, %v944
    %v950 = vsel %vm762, %v946, %v943
    %v951 = vsel %vm767, %v950, 0.0
    %v952 = vsel %vm768, %v949, 0.0
    %v953 = vsel %vm769, %v948, 0.0
    %v954 = vsel %vm770, %v947, 0.0
    %v955 = vadd.f32 %v951, %v927
    %v956 = vadd.f32 %v952, %v931
    %v957 = vadd.f32 %v953, %v937
    %v958 = vadd.f32 %v954, %v941
    %v959 = vld [vmem:[#allocation7 + $0x4] sm:$0x1]
    %v960 = vlaneseq
    %v961 = vshrl.u32 %v960, 7
    %v962 = vsub.s32 0, %v961
    %v963 = vrot.slane %v959, %v962
    %v964 = vadd.f32 %v955, %v963
    %v965 = vadd.f32 %v956, %v963
    %v966 = vadd.f32 %v957, %v963
    %v967 = vadd.f32 %v958, %v963
    %v968 = vmax.f32 %v964, 0.0
    %v969 = vmax.f32 %v965, 0.0
    %v970 = vmax.f32 %v966, 0.0
    %v971 = vmax.f32 %v967, 0.0
    %v972 = vadd.f32 %v968, %v603
    %v973 = vadd.f32 %v969, %v604
    %v974 = vadd.f32 %v970, %v605
    %v975 = vadd.f32 %v971, %v606
    %v976 = vmax.f32 %v972, 0.0
    %v977 = vmax.f32 %v973, 0.0
    %v978 = vmax.f32 %v974, 0.0
    %v979 = vmax.f32 %v975, 0.0
    %980 = vst [vmem:[#allocation8] sm:$0xff] %v976
    %981 = vst [vmem:[#allocation8 + $0x8] sm:$0xff] %v977
    %982 = vst [vmem:[#allocation8 + $0x10] sm:$0xff] %v978
    %983 = vst [vmem:[#allocation8 + $0x18] sm:$0xff] %v979
    // Predicated region
    $region26: #{tpu_custom_call.1} parent=1 // pred_check
      _
    $region27: #{tpu_custom_call.1} parent=1 // pred_check_branch
      %985 = sbr.rel (0) target = $region29
    $region28: #{tpu_custom_call.1} parent=1 // pred_region
      %s987 = ssub.s32 512, 512
      %988 = vsyncadd [#allocation4], %s987
      %s989 = sshll.u32 [#allocation8], 4
      %s990 = int_to_ptr.vmem [resolvable:$true] %s989
      %995 = dma.vmem_to_hbm [thread:$0]  %s990, 512, %s3, [#allocation4], 128, 128, 8
    $region29: #{tpu_custom_call.1} parent=1 // pred_fallthru
      _
    // Predicated region
    $region30: #{tpu_custom_call.1} parent=1 // pred_check
      _
    $region31: #{tpu_custom_call.1} parent=1 // pred_check_branch
      %997 = sbr.rel (0) target = $region33
    $region32: #{tpu_custom_call.1} parent=1 // pred_region
      %998 = dma.done [#allocation4], 512
    $region33: #{tpu_custom_call.1} parent=1 // pred_fallthru
      _
    %999 = vsyncpa [#allocation3], 1
    %1000 = vsyncpa [#allocation6], 1
    %1001 = vsyncpa [#allocation4], 1

</llo_original>
